<compile_context>
chip_gen: v6e
topology: v6e:2x2x1
jax: 0.10.0
libtpu: 0.0.40
codegen_flags: <defaults>
</compile_context>

<pallas_src>
import jax
import jax.numpy as jnp
from jax.experimental import pallas as pl
from jax.experimental.pallas import tpu as pltpu


def _round_up(v, m):
    return (v + m - 1) // m * m


def _pad2(x, rows, cols):
    return jnp.pad(x, ((0, rows - x.shape[0]), (0, cols - x.shape[1])))


# ---------------------------------------------------------------------------
# Fused 2-layer GCN kernel:
#   h   = ReLU( d * ( (A+I) @ (d * (X  @ W1)) ) + b1 )   (h kept in VMEM)
#   out = ReLU( d * ( (A+I) @ (d * (h  @ W2)) ) + b2 )
# where d = D^{-1/2} (row scale), so  d * ((A+I) @ (d * M)) == A_hat @ M.
# All matmuls: bf16 inputs on the MXU, f32 accumulation; epilogue in f32.
# ---------------------------------------------------------------------------
def _gcl_fused_kernel(a_ref, d_ref, x_ref, w1_ref, b1_ref, w2_ref, b2_ref,
                      o_ref, h_scratch):
    d = d_ref[...]          # (Np, 1)  f32
    a = a_ref[...]          # (Np, Np) bf16  (A + I, exact 0/1 values)

    # ---- layer 1 ----
    xw1 = jnp.dot(x_ref[...], w1_ref[...],
                  preferred_element_type=jnp.float32)          # (Np, Hp) f32
    t1 = (d * xw1).astype(jnp.bfloat16)                        # right D^{-1/2}
    agg1 = jnp.dot(a, t1, preferred_element_type=jnp.float32)  # (A+I) @ .
    h = jnp.maximum(d * agg1 + b1_ref[...], 0.0)               # left D^{-1/2}, bias, ReLU
    h_scratch[...] = h.astype(jnp.bfloat16)                    # stays in VMEM

    # ---- layer 2 ----
    xw2 = jnp.dot(h_scratch[...], w2_ref[...],
                  preferred_element_type=jnp.float32)          # (Np, Op) f32
    t2 = (d * xw2).astype(jnp.bfloat16)
    agg2 = jnp.dot(a, t2, preferred_element_type=jnp.float32)
    out = jnp.maximum(d * agg2 + b2_ref[...], 0.0)
    o_ref[...] = out.astype(o_ref.dtype)


# ---------------------------------------------------------------------------
# Wrapper: GCL / Encoder forward (k = 2)
# ---------------------------------------------------------------------------
def gcl_forward(params, x, a):
    assert len(params) == 2, "fused kernel implements the default k=2 encoder"
    (w1, b1), (w2, b2) = params

    n, f_in = x.shape
    h_dim = w1.shape[1]
    out_dim = w2.shape[1]

    n_p = _round_up(n, 8)          # sublane-aligned node dim
    f_in_p = _round_up(f_in, 128)  # lane-dense feature dims
    h_p = _round_up(h_dim, 128)
    out_p = _round_up(out_dim, 128)

    # A + I and the D^{-1/2} scale vector (scaled dense A_hat never built).
    a_self = a + jnp.eye(n, dtype=a.dtype)
    deg = jnp.sum(a_self, axis=1)
    d = jnp.where(deg > 0, 1.0 / jnp.sqrt(deg), 0.0).astype(jnp.float32)

    a_p = _pad2(a_self, n_p, n_p).astype(jnp.bfloat16)   # exact 0/1 in bf16
    d_p = _pad2(d[:, None], n_p, 1).astype(jnp.float32)
    x_p = _pad2(x, n_p, f_in_p).astype(jnp.bfloat16)
    w1_p = _pad2(w1, f_in_p, h_p).astype(jnp.bfloat16)
    w2_p = _pad2(w2, h_p, out_p).astype(jnp.bfloat16)
    b1_p = _pad2(b1[None, :], 1, h_p).astype(jnp.float32)
    b2_p = _pad2(b2[None, :], 1, out_p).astype(jnp.float32)

    out_padded = pl.pallas_call(
        _gcl_fused_kernel,
        out_shape=jax.ShapeDtypeStruct((n_p, out_p), jnp.float32),
        grid=(1,),
        in_specs=[
            pl.BlockSpec((n_p, n_p), lambda i: (0, 0)),      # A + I
            pl.BlockSpec((n_p, 1), lambda i: (0, 0)),        # d = D^{-1/2}
            pl.BlockSpec((n_p, f_in_p), lambda i: (0, 0)),   # X
            pl.BlockSpec((f_in_p, h_p), lambda i: (0, 0)),   # W1
            pl.BlockSpec((1, h_p), lambda i: (0, 0)),        # b1
            pl.BlockSpec((h_p, out_p), lambda i: (0, 0)),    # W2
            pl.BlockSpec((1, out_p), lambda i: (0, 0)),      # b2
        ],
        out_specs=pl.BlockSpec((n_p, out_p), lambda i: (0, 0)),
        scratch_shapes=[pltpu.VMEM((n_p, h_p), jnp.bfloat16)],  # layer-1 act
        compiler_params=pltpu.CompilerParams(
            dimension_semantics=("arbitrary",)),
    )(a_p, d_p, x_p, w1_p, b1_p, w2_p, b2_p)

    return out_padded[:n, :out_dim]


def init_gcl_params(key, in_channels, out_channels, k=2):
    """Parameter init matching Encoder.__init__ shapes (k=2)."""
    dims = [in_channels, 2 * out_channels, out_channels]
    params = []
    for i in range(k):
        key, wk = jax.random.split(key)
        f_in, f_out = dims[i], dims[i + 1]
        w = jax.random.normal(wk, (f_in, f_out), dtype=jnp.float32) * 0.1
        b = jnp.zeros((f_out,), dtype=jnp.float32)
        params.append((w, b))
    return params


# ---------------------------------------------------------------------------
# References (for correctness checking only)
# ---------------------------------------------------------------------------
def _ref_f32(params, x, a):
    n = a.shape[0]
    a_self = a + jnp.eye(n, dtype=a.dtype)
    deg = jnp.sum(a_self, axis=1)
    dinv = jnp.where(deg > 0, 1.0 / jnp.sqrt(deg), 0.0)
    a_hat = a_self * dinv[:, None] * dinv[None, :]
    h = x
    for (w, b) in params:
        h = jnp.maximum(a_hat @ (h @ w) + b, 0.0)
    return h


def _ref_bf16_matched(params, x, a):
    """Same math / same bf16 rounding points as the kernel."""
    n = a.shape[0]
    a_self = (a + jnp.eye(n, dtype=a.dtype)).astype(jnp.bfloat16)
    deg = jnp.sum(a + jnp.eye(n, dtype=a.dtype), axis=1)
    d = jnp.where(deg > 0, 1.0 / jnp.sqrt(deg), 0.0).astype(jnp.float32)
    h = x.astype(jnp.float32)
    for (w, b) in params:
        xw = jnp.dot(h.astype(jnp.bfloat16), w.astype(jnp.bfloat16),
                     preferred_element_type=jnp.float32)
        t = (d[:, None] * xw).astype(jnp.bfloat16)
        agg = jnp.dot(a_self, t, preferred_element_type=jnp.float32)
        h = jnp.maximum(d[:, None] * agg + b, 0.0)
    return h


if __name__ == "__main__":
    key = jax.random.PRNGKey(0)

    N, IN_CH, OUT_CH = 16, 8, 4  # small shapes consistent with the module
    kx, ka, kp = jax.random.split(key, 3)

    x = jax.random.normal(kx, (N, IN_CH), dtype=jnp.float32)
    # symmetric 0/1 adjacency, no self loops
    a_rand = jax.random.uniform(ka, (N, N))
    a = (a_rand > 0.6).astype(jnp.float32)
    a = jnp.triu(a, 1)
    a = a + a.T

    params = init_gcl_params(kp, IN_CH, OUT_CH, k=2)

    out = gcl_forward(params, x, a)
    out = jax.block_until_ready(out)
    assert out.shape == (N, OUT_CH)

    # tight check vs a reference with identical bf16 rounding points
    ref_m = _ref_bf16_matched(params, x, a)
    assert jnp.allclose(out, ref_m, atol=1e-3, rtol=1e-3), \
        float(jnp.max(jnp.abs(out - ref_m)))

    # loose sanity check vs the full-f32 reference (bf16 MXU inputs)
    ref = _ref_f32(params, x, a)
    assert jnp.allclose(out, ref, atol=5e-2, rtol=5e-2), \
        float(jnp.max(jnp.abs(out - ref)))

    print("KERNEL_OK")
</pallas_src>

<mosaic_0001>
module attributes {stable_mosaic.version = 11 : i64} {
  func.func @_gcl_fused_kernel(%arg0: i32, %arg1: memref<16x16xbf16, #tpu.memory_space<vmem>>, %arg2: memref<16x1xf32, #tpu.memory_space<vmem>>, %arg3: memref<16x128xbf16, #tpu.memory_space<vmem>>, %arg4: memref<128x128xbf16, #tpu.memory_space<vmem>>, %arg5: memref<1x128xf32, #tpu.memory_space<vmem>>, %arg6: memref<128x128xbf16, #tpu.memory_space<vmem>>, %arg7: memref<1x128xf32, #tpu.memory_space<vmem>>, %arg8: memref<16x128xf32, #tpu.memory_space<vmem>>, %arg9: memref<16x128xbf16, #tpu.memory_space<vmem>>) attributes {dimension_semantics = [#tpu.dimension_semantics<arbitrary>], iteration_bounds = array<i64: 1>, scalar_prefetch = 0 : i64, scratch_operands = 1 : i64, tpu.core_type = #tpu.core_type<tc>, window_params = [{pipeline_mode = #tpu.pipeline_mode<synchronous>, transform_indices = @transform_0, window_bounds = array<i64: 16, 16>}, {pipeline_mode = #tpu.pipeline_mode<synchronous>, transform_indices = @transform_1, window_bounds = array<i64: 16, 1>}, {pipeline_mode = #tpu.pipeline_mode<synchronous>, transform_indices = @transform_2, window_bounds = array<i64: 16, 128>}, {pipeline_mode = #tpu.pipeline_mode<synchronous>, transform_indices = @transform_3, window_bounds = array<i64: 128, 128>}, {pipeline_mode = #tpu.pipeline_mode<synchronous>, transform_indices = @transform_4, window_bounds = array<i64: 1, 128>}, {pipeline_mode = #tpu.pipeline_mode<synchronous>, transform_indices = @transform_5, window_bounds = array<i64: 128, 128>}, {pipeline_mode = #tpu.pipeline_mode<synchronous>, transform_indices = @transform_6, window_bounds = array<i64: 1, 128>}, {pipeline_mode = #tpu.pipeline_mode<synchronous>, transform_indices = @transform_7, window_bounds = array<i64: 16, 128>}]} {
    %c0 = arith.constant 0 : index
    %c0_0 = arith.constant 0 : index
    %0 = vector.load %arg2[%c0, %c0_0] : memref<16x1xf32, #tpu.memory_space<vmem>>, vector<16x1xf32>
    %c0_1 = arith.constant 0 : index
    %c0_2 = arith.constant 0 : index
    %1 = vector.load %arg1[%c0_1, %c0_2] : memref<16x16xbf16, #tpu.memory_space<vmem>>, vector<16x16xbf16>
    %c0_3 = arith.constant 0 : index
    %c0_4 = arith.constant 0 : index
    %2 = vector.load %arg3[%c0_3, %c0_4] : memref<16x128xbf16, #tpu.memory_space<vmem>>, vector<16x128xbf16>
    %c0_5 = arith.constant 0 : index
    %c0_6 = arith.constant 0 : index
    %3 = vector.load %arg4[%c0_5, %c0_6] : memref<128x128xbf16, #tpu.memory_space<vmem>>, vector<128x128xbf16>
    %cst = arith.constant dense<0.000000e+00> : vector<16x128xf32>
    %4 = tpu.matmul %2, %3, %cst {dimension_numbers = #tpu.dot_dimension_numbers<[1], [0], [0], [1], [0, 0, 1, 1], [], []>} : vector<16x128xbf16>, vector<128x128xbf16>, vector<16x128xf32> -> vector<16x128xf32>
    %5 = vector.broadcast %0 : vector<16x1xf32> to vector<16x128xf32>
    %6 = arith.mulf %5, %4 : vector<16x128xf32>
    %7 = arith.truncf %6 : vector<16x128xf32> to vector<16x128xbf16>
    %cst_7 = arith.constant dense<0.000000e+00> : vector<16x128xf32>
    %8 = tpu.matmul %1, %7, %cst_7 {dimension_numbers = #tpu.dot_dimension_numbers<[1], [0], [0], [1], [0, 0, 1, 1], [], []>} : vector<16x16xbf16>, vector<16x128xbf16>, vector<16x128xf32> -> vector<16x128xf32>
    %9 = vector.broadcast %0 : vector<16x1xf32> to vector<16x128xf32>
    %10 = arith.mulf %9, %8 : vector<16x128xf32>
    %c0_8 = arith.constant 0 : index
    %c0_9 = arith.constant 0 : index
    %11 = vector.load %arg5[%c0_8, %c0_9] : memref<1x128xf32, #tpu.memory_space<vmem>>, vector<1x128xf32>
    %12 = vector.broadcast %11 : vector<1x128xf32> to vector<16x128xf32>
    %13 = arith.addf %10, %12 : vector<16x128xf32>
    %cst_10 = arith.constant 0.000000e+00 : f32
    %14 = vector.broadcast %cst_10 : f32 to vector<16x128xf32>
    %15 = arith.maximumf %13, %14 : vector<16x128xf32>
    %16 = arith.truncf %15 : vector<16x128xf32> to vector<16x128xbf16>
    %c0_11 = arith.constant 0 : index
    %c0_12 = arith.constant 0 : index
    %17 = vector.load %arg9[%c0_11, %c0_12] : memref<16x128xbf16, #tpu.memory_space<vmem>>, vector<16x128xbf16>
    tpu.vector_store %arg9[%c0_11, %c0_12], %16 {strides = array<i32>} : memref<16x128xbf16, #tpu.memory_space<vmem>>, vector<16x128xbf16>,
    %c0_13 = arith.constant 0 : index
    %c0_14 = arith.constant 0 : index
    %18 = vector.load %arg9[%c0_13, %c0_14] : memref<16x128xbf16, #tpu.memory_space<vmem>>, vector<16x128xbf16>
    %c0_15 = arith.constant 0 : index
    %c0_16 = arith.constant 0 : index
    %19 = vector.load %arg6[%c0_15, %c0_16] : memref<128x128xbf16, #tpu.memory_space<vmem>>, vector<128x128xbf16>
    %cst_17 = arith.constant dense<0.000000e+00> : vector<16x128xf32>
    %20 = tpu.matmul %18, %19, %cst_17 {dimension_numbers = #tpu.dot_dimension_numbers<[1], [0], [0], [1], [0, 0, 1, 1], [], []>} : vector<16x128xbf16>, vector<128x128xbf16>, vector<16x128xf32> -> vector<16x128xf32>
    %21 = vector.broadcast %0 : vector<16x1xf32> to vector<16x128xf32>
    %22 = arith.mulf %21, %20 : vector<16x128xf32>
    %23 = arith.truncf %22 : vector<16x128xf32> to vector<16x128xbf16>
    %cst_18 = arith.constant dense<0.000000e+00> : vector<16x128xf32>
    %24 = tpu.matmul %1, %23, %cst_18 {dimension_numbers = #tpu.dot_dimension_numbers<[1], [0], [0], [1], [0, 0, 1, 1], [], []>} : vector<16x16xbf16>, vector<16x128xbf16>, vector<16x128xf32> -> vector<16x128xf32>
    %25 = vector.broadcast %0 : vector<16x1xf32> to vector<16x128xf32>
    %26 = arith.mulf %25, %24 : vector<16x128xf32>
    %c0_19 = arith.constant 0 : index
    %c0_20 = arith.constant 0 : index
    %27 = vector.load %arg7[%c0_19, %c0_20] : memref<1x128xf32, #tpu.memory_space<vmem>>, vector<1x128xf32>
    %28 = vector.broadcast %27 : vector<1x128xf32> to vector<16x128xf32>
    %29 = arith.addf %26, %28 : vector<16x128xf32>
    %cst_21 = arith.constant 0.000000e+00 : f32
    %30 = vector.broadcast %cst_21 : f32 to vector<16x128xf32>
    %31 = arith.maximumf %29, %30 : vector<16x128xf32>
    %c0_22 = arith.constant 0 : index
    %c0_23 = arith.constant 0 : index
    %32 = vector.load %arg8[%c0_22, %c0_23] : memref<16x128xf32, #tpu.memory_space<vmem>>, vector<16x128xf32>
    tpu.vector_store %arg8[%c0_22, %c0_23], %31 {strides = array<i32>} : memref<16x128xf32, #tpu.memory_space<vmem>>, vector<16x128xf32>,
    return
  }
  func.func @transform_0(%arg0: i32) -> (i32, i32) {
    %c0_i32 = arith.constant 0 : i32
    %c0_i32_0 = arith.constant 0 : i32
    %c0_i32_1 = arith.constant 0 : i32
    return %c0_i32, %c0_i32_0 : i32, i32
  }
  func.func @transform_1(%arg0: i32) -> (i32, i32) {
    %c0_i32 = arith.constant 0 : i32
    %c0_i32_0 = arith.constant 0 : i32
    %c0_i32_1 = arith.constant 0 : i32
    return %c0_i32, %c0_i32_0 : i32, i32
  }
  func.func @transform_2(%arg0: i32) -> (i32, i32) {
    %c0_i32 = arith.constant 0 : i32
    %c0_i32_0 = arith.constant 0 : i32
    %c0_i32_1 = arith.constant 0 : i32
    return %c0_i32, %c0_i32_0 : i32, i32
  }
  func.func @transform_3(%arg0: i32) -> (i32, i32) {
    %c0_i32 = arith.constant 0 : i32
    %c0_i32_0 = arith.constant 0 : i32
    %c0_i32_1 = arith.constant 0 : i32
    return %c0_i32, %c0_i32_0 : i32, i32
  }
  func.func @transform_4(%arg0: i32) -> (i32, i32) {
    %c0_i32 = arith.constant 0 : i32
    %c0_i32_0 = arith.constant 0 : i32
    %c0_i32_1 = arith.constant 0 : i32
    return %c0_i32, %c0_i32_0 : i32, i32
  }
  func.func @transform_5(%arg0: i32) -> (i32, i32) {
    %c0_i32 = arith.constant 0 : i32
    %c0_i32_0 = arith.constant 0 : i32
    %c0_i32_1 = arith.constant 0 : i32
    return %c0_i32, %c0_i32_0 : i32, i32
  }
  func.func @transform_6(%arg0: i32) -> (i32, i32) {
    %c0_i32 = arith.constant 0 : i32
    %c0_i32_0 = arith.constant 0 : i32
    %c0_i32_1 = arith.constant 0 : i32
    return %c0_i32, %c0_i32_0 : i32, i32
  }
  func.func @transform_7(%arg0: i32) -> (i32, i32) {
    %c0_i32 = arith.constant 0 : i32
    %c0_i32_0 = arith.constant 0 : i32
    %c0_i32_1 = arith.constant 0 : i32
    return %c0_i32, %c0_i32_0 : i32, i32
  }
}

</mosaic_0001>

<llo_original>
// kernel: tpu_custom_call.1
$region0: #{tpu_custom_call.1}
  #allocation0 [shape = 'u32[]', space=smem, size = 0x4, offset = 0x4, fixed_abs, tag = 'smem constant byte address 0x4 - core index']
  #allocation1 [shape = 'u32[144,128]{1,0:T(1,128)}', space=vmem, size = 0x12000, scoped, tag = 'internal scratch']
  #allocation2 [shape = 'bf16[16,128]{1,0:T(8,128)(2,1)}', space=vmem, size = 0x1000, scoped, tag = 'scratch operand']
  %s0 = inlined_call_operand.vmem [shape: bf16[16,16], index: 0, kind: input, shape index: {}]
  %s1 = inlined_call_operand.vmem [shape: f32[16,1], index: 1, kind: input, shape index: {}]
  %s2 = inlined_call_operand.vmem [shape: bf16[16,128], index: 2, kind: input, shape index: {}]
  %s3 = inlined_call_operand.hbm [shape: bf16[128,128], index: 3, kind: input, shape index: {}]
  %s4 = inlined_call_operand.vmem [shape: f32[1,128], index: 4, kind: input, shape index: {}]
  %s5 = inlined_call_operand.hbm [shape: bf16[128,128], index: 5, kind: input, shape index: {}]
  %s6 = inlined_call_operand.vmem [shape: f32[1,128], index: 6, kind: input, shape index: {}]
  %s7 = inlined_call_operand.hbm [shape: f32[16,128], index: 7, kind: output, shape index: {}]
  %s8 = sld [smem:[#allocation0]]
  $region46: #{tpu_custom_call.1} parent=0
    _
  %s10 = ssub.s32 1, %s8
  %s11 = scalar_select 0, %s10, %s8
  $region1: #{tpu_custom_call.1} parent=0
    #allocation3 [shape = 'u8[32768]{0}', space=vmem, size = 0x8000, scoped, tag = 'input window, operand 3, single buffered']
    #allocation4 [shape = 's32[1]{0}', space=sflag, size = 0x4, scoped, tag = 'scoped memory for tpu_custom_call.1']
    #allocation5 [shape = 's32[1]{0}', space=sflag, size = 0x4, scoped, tag = 'scoped memory for tpu_custom_call.1']
    #allocation6 [shape = 'u8[32768]{0}', space=vmem, size = 0x8000, scoped, tag = 'input window, operand 5, single buffered']
    #allocation7 [shape = 's32[1]{0}', space=sflag, size = 0x4, scoped, tag = 'scoped memory for tpu_custom_call.1']
    #allocation8 [shape = 'u8[8192]{0}', space=vmem, size = 0x2000, scoped, tag = 'output window, operand 0, single buffered']
    %12 = vsyncpa [#allocation4], 0
    %13 = vsyncpa [#allocation7], 0
    %14 = vsyncpa [#allocation5], 0
    // Predicated region
    $region2: #{tpu_custom_call.1} parent=1 // pred_check
      _
    $region3: #{tpu_custom_call.1} parent=1 // pred_check_branch
      %16 = sbr.rel (0) target = $region5
    $region4: #{tpu_custom_call.1} parent=1 // pred_region
      _
    $region5: #{tpu_custom_call.1} parent=1 // pred_fallthru
      _
    // Predicated region
    $region6: #{tpu_custom_call.1} parent=1 // pred_check
      _
    $region7: #{tpu_custom_call.1} parent=1 // pred_check_branch
      %18 = sbr.rel (0) target = $region9
    $region8: #{tpu_custom_call.1} parent=1 // pred_region
      _
    $region9: #{tpu_custom_call.1} parent=1 // pred_fallthru
      _
    // Predicated region
    $region10: #{tpu_custom_call.1} parent=1 // pred_check
      _
    $region11: #{tpu_custom_call.1} parent=1 // pred_check_branch
      %20 = sbr.rel (0) target = $region13
    $region12: #{tpu_custom_call.1} parent=1 // pred_region
      _
    $region13: #{tpu_custom_call.1} parent=1 // pred_fallthru
      _
    // Predicated region
    $region14: #{tpu_custom_call.1} parent=1 // pred_check
      _
    $region15: #{tpu_custom_call.1} parent=1 // pred_check_branch
      %22 = sbr.rel (0) target = $region17
    $region16: #{tpu_custom_call.1} parent=1 // pred_region
      %s24 = ssub.s32 1024, 1024
      %25 = vsyncadd [#allocation4], %s24
      %s26 = sshll.u32 [#allocation3], 4
      %s27 = int_to_ptr.vmem [resolvable:$true] %s26
      %32 = dma.hbm_to_vmem [thread:$0]  %s3, 1024, %s27, [#allocation4], 64, 64, 4
    $region17: #{tpu_custom_call.1} parent=1 // pred_fallthru
      _
    // Predicated region
    $region18: #{tpu_custom_call.1} parent=1 // pred_check
      _
    $region19: #{tpu_custom_call.1} parent=1 // pred_check_branch
      %34 = sbr.rel (0) target = $region21
    $region20: #{tpu_custom_call.1} parent=1 // pred_region
      _
    $region21: #{tpu_custom_call.1} parent=1 // pred_fallthru
      _
    // Predicated region
    $region22: #{tpu_custom_call.1} parent=1 // pred_check
      _
    $region23: #{tpu_custom_call.1} parent=1 // pred_check_branch
      %36 = sbr.rel (0) target = $region25
    $region24: #{tpu_custom_call.1} parent=1 // pred_region
      %s38 = ssub.s32 1024, 1024
      %39 = vsyncadd [#allocation7], %s38
      %s40 = sshll.u32 [#allocation6], 4
      %s41 = int_to_ptr.vmem [resolvable:$true] %s40
      %46 = dma.hbm_to_vmem [thread:$0]  %s5, 1024, %s41, [#allocation7], 64, 64, 4
    $region25: #{tpu_custom_call.1} parent=1 // pred_fallthru
      _
    // Predicated region
    $region26: #{tpu_custom_call.1} parent=1 // pred_check
      _
    $region27: #{tpu_custom_call.1} parent=1 // pred_check_branch
      %48 = sbr.rel (0) target = $region29
    $region28: #{tpu_custom_call.1} parent=1 // pred_region
      _
    $region29: #{tpu_custom_call.1} parent=1 // pred_fallthru
      _
    // Predicated region
    $region30: #{tpu_custom_call.1} parent=1 // pred_check
      _
    $region31: #{tpu_custom_call.1} parent=1 // pred_check_branch
      %50 = sbr.rel (0) target = $region33
    $region32: #{tpu_custom_call.1} parent=1 // pred_region
      %51 = dma.done [#allocation4], 1024
    $region33: #{tpu_custom_call.1} parent=1 // pred_fallthru
      _
    // Predicated region
    $region34: #{tpu_custom_call.1} parent=1 // pred_check
      _
    $region35: #{tpu_custom_call.1} parent=1 // pred_check_branch
      %53 = sbr.rel (0) target = $region37
    $region36: #{tpu_custom_call.1} parent=1 // pred_region
      %54 = dma.done [#allocation7], 1024
    $region37: #{tpu_custom_call.1} parent=1 // pred_fallthru
      _
    %v56 = vld [vmem:[%s1] sm:$0xff]
    %v57 = vld [vmem:[%s1 + $0x8] sm:$0xff]
    %v58 = vld [vmem:[%s0] sm:$0xf]
    %v59 = vld [vmem:[%s0 + $0x4] sm:$0xf]
    %v60 = vld [vmem:[%s2] sm:$0xf]
    %v61 = vld [vmem:[%s2 + $0x4] sm:$0xf]
    %v62 = vld [vmem:[#allocation3] sm:$0xf]
    %v63 = vld [vmem:[#allocation3 + $0x4] sm:$0xf]
    %v64 = vld [vmem:[#allocation3 + $0x8] sm:$0xf]
    %v65 = vld [vmem:[#allocation3 + $0xc] sm:$0xf]
    %v66 = vld [vmem:[#allocation3 + $0x10] sm:$0xf]
    %v67 = vld [vmem:[#allocation3 + $0x14] sm:$0xf]
    %v68 = vld [vmem:[#allocation3 + $0x18] sm:$0xf]
    %v69 = vld [vmem:[#allocation3 + $0x1c] sm:$0xf]
    %v70 = vld [vmem:[#allocation3 + $0x20] sm:$0xf]
    %v71 = vld [vmem:[#allocation3 + $0x24] sm:$0xf]
    %v72 = vld [vmem:[#allocation3 + $0x28] sm:$0xf]
    %v73 = vld [vmem:[#allocation3 + $0x2c] sm:$0xf]
    %v74 = vld [vmem:[#allocation3 + $0x30] sm:$0xf]
    %v75 = vld [vmem:[#allocation3 + $0x34] sm:$0xf]
    %v76 = vld [vmem:[#allocation3 + $0x38] sm:$0xf]
    %v77 = vld [vmem:[#allocation3 + $0x3c] sm:$0xf]
    %v80 = vunpack.c.l.b16 %v60
    %v81 = vunpack.c.l.b16 %v61
    %v82 = vpack.c.b16 %v81, %v80
    %v100 = vunpack.c.l.b16 %v62
    %v101 = vunpack.c.l.b16 %v63
    %v102 = vunpack.c.l.b16 %v64
    %v103 = vunpack.c.l.b16 %v65
    %v104 = vunpack.c.l.b16 %v66
    %v105 = vunpack.c.l.b16 %v67
    %v106 = vunpack.c.l.b16 %v68
    %v107 = vunpack.c.l.b16 %v69
    %v108 = vunpack.c.l.b16 %v70
    %v109 = vunpack.c.l.b16 %v71
    %v110 = vunpack.c.l.b16 %v72
    %v111 = vunpack.c.l.b16 %v73
    %v112 = vunpack.c.l.b16 %v74
    %v113 = vunpack.c.l.b16 %v75
    %v114 = vunpack.c.l.b16 %v76
    %v115 = vunpack.c.l.b16 %v77
    %v116 = vpack.c.b16 %v101, %v100
    %v117 = vpack.c.b16 %v103, %v102
    %v118 = vpack.c.b16 %v105, %v104
    %v119 = vpack.c.b16 %v107, %v106
    %v120 = vpack.c.b16 %v109, %v108
    %v121 = vpack.c.b16 %v111, %v110
    %v122 = vpack.c.b16 %v113, %v112
    %v123 = vpack.c.b16 %v115, %v114
    %132 = vmatprep.subr.bf16.mxu0 0
    %133 = vmatpush1.bf16.msra.mxu0 %v123
    %134 = vmatprep.subr.bf16.mxu0 0
    %135 = vmatpush1.bf16.msra.mxu0 %v122
    %136 = vmatprep.subr.bf16.mxu0 0
    %137 = vmatpush1.bf16.msra.mxu0 %v121
    %138 = vmatprep.subr.bf16.mxu0 0
    %139 = vmatpush1.bf16.msra.mxu0 %v120
    %140 = vmatprep.subr.bf16.mxu0 0
    %141 = vmatpush1.bf16.msra.mxu0 %v119
    %142 = vmatprep.subr.bf16.mxu0 0
    %143 = vmatpush1.bf16.msra.mxu0 %v118
    %144 = vmatprep.subr.bf16.mxu0 0
    %145 = vmatpush1.bf16.msra.mxu0 %v117
    %146 = vmatprep.subr.bf16.mxu0 0
    %147 = vmatpush1.bf16.msra.mxu0 %v116
    %148 = vmatprep.subr.bf16.mxu0 0
    %149 = vmatpush2.bf16.msra.mxu0 0
    %150 = vmatprep.subr.bf16.mxu0 0
    %151 = vmatpush2.bf16.msra.mxu0 0
    %152 = vmatprep.subr.bf16.mxu0 0
    %153 = vmatpush2.bf16.msra.mxu0 0
    %154 = vmatprep.subr.bf16.mxu0 0
    %155 = vmatpush2.bf16.msra.mxu0 0
    %156 = vmatprep.subr.bf16.mxu0 0
    %157 = vmatpush2.bf16.msra.mxu0 0
    %158 = vmatprep.subr.bf16.mxu0 0
    %159 = vmatpush2.bf16.msra.mxu0 0
    %160 = vmatprep.subr.bf16.mxu0 0
    %161 = vmatpush2.bf16.msra.mxu0 0
    %162 = vmatprep.subr.bf16.mxu0 0
    %163 = vmatpush2.bf16.msra.mxu0 0
    %164 = vmatprep.mubr.bf16.mxu0 0
    %165 = vmatmul.mubr.bf16.gmra.mxu0 %v82
    %v166 = vpop.f32.mrf.mxu0
    %v167 = vadd.f32 0.0, %v166
    %v168 = vpop.f32.mrf.mxu0
    %v169 = vpop.f32.mrf.mxu0
    %v170 = vadd.f32 0.0, %v169
    %v171 = vpop.f32.mrf.mxu0
    %172 = vdwg.mxu0
    %174 = vset.pattern.permute.xlu0 0
    %175 = vperm.xlu0 %174, %v56
    %v176 = vpop.permute.xlu0 %175
    %179 = vset.pattern.permute.xlu0 0
    %180 = vperm.xlu0 %179, %v57
    %v181 = vpop.permute.xlu0 %180
    %v183 = vmul.f32 %v176, %v167
    %v184 = vmul.f32 %v181, %v170
    %v185 = vpack.c.bf16 %v184, %v183
    %v188 = vunpack.c.l.b16 %v58
    %v189 = vunpack.c.l.b16 %v59
    %v190 = vpack.c.b16 %v189, %v188
    %vm191 = vcmask 130048
    %v193 = vsel %vm191, %v190, 0
    %195 = vmatprep.subr.bf16.mxu0 0
    %196 = vmatpush1.bf16.msra.mxu0 0
    %197 = vmatprep.subr.bf16.mxu0 0
    %198 = vmatpush1.bf16.msra.mxu0 0
    %199 = vmatprep.subr.bf16.mxu0 0
    %200 = vmatpush1.bf16.msra.mxu0 0
    %201 = vmatprep.subr.bf16.mxu0 0
    %202 = vmatpush1.bf16.msra.mxu0 0
    %203 = vmatprep.subr.bf16.mxu0 0
    %204 = vmatpush1.bf16.msra.mxu0 0
    %205 = vmatprep.subr.bf16.mxu0 0
    %206 = vmatpush1.bf16.msra.mxu0 0
    %207 = vmatprep.subr.bf16.mxu0 0
    %208 = vmatpush1.bf16.msra.mxu0 0
    %209 = vmatprep.subr.bf16.mxu0 0
    %210 = vmatpush1.bf16.msra.mxu0 %v185
    %211 = vmatprep.subr.bf16.mxu0 0
    %212 = vmatpush2.bf16.msra.mxu0 0
    %213 = vmatprep.subr.bf16.mxu0 0
    %214 = vmatpush2.bf16.msra.mxu0 0
    %215 = vmatprep.subr.bf16.mxu0 0
    %216 = vmatpush2.bf16.msra.mxu0 0
    %217 = vmatprep.subr.bf16.mxu0 0
    %218 = vmatpush2.bf16.msra.mxu0 0
    %219 = vmatprep.subr.bf16.mxu0 0
    %220 = vmatpush2.bf16.msra.mxu0 0
    %221 = vmatprep.subr.bf16.mxu0 0
    %222 = vmatpush2.bf16.msra.mxu0 0
    %223 = vmatprep.subr.bf16.mxu0 0
    %224 = vmatpush2.bf16.msra.mxu0 0
    %225 = vmatprep.subr.bf16.mxu0 0
    %226 = vmatpush2.bf16.msra.mxu0 0
    %227 = vmatprep.mubr.bf16.mxu0 0
    %228 = vmatmul.mubr.bf16.gmra.mxu0 %v193
    %v229 = vpop.f32.mrf.mxu0
    %v230 = vadd.f32 0.0, %v229
    %v231 = vpop.f32.mrf.mxu0
    %v232 = vpop.f32.mrf.mxu0
    %v233 = vadd.f32 0.0, %v232
    %v234 = vpop.f32.mrf.mxu0
    %235 = vdwg.mxu0
    %v236 = vmul.f32 %v176, %v230
    %v237 = vmul.f32 %v181, %v233
    %v238 = vld [vmem:[%s4] sm:$0x1]
    %v240 = vlaneseq
    %v241 = vshrl.u32 %v240, 7
    %v242 = vsub.s32 0, %v241
    %v243 = vrot.slane %v238, %v242
    %v245 = vadd.f32 %v236, %v243
    %v246 = vadd.f32 %v237, %v243
    %v247 = vmax.f32 %v245, 0.0
    %v248 = vmax.f32 %v246, 0.0
    %v249 = vpack.c.bf16 %v248, %v247
    %v251 = vunpack.c.l.b16 %v249
    %v252 = vunpack.c.h.b16 %v249
    %v253 = vpack.c.b16 %v251, %v251
    %v254 = vpack.c.b16 %v252, %v252
    %257 = vst [vmem:[#allocation2] sm:$0xf] %v253
    %258 = vst [vmem:[#allocation2 + $0x4] sm:$0xf] %v254
    %v259 = vld [vmem:[#allocation2] sm:$0xf]
    %v260 = vld [vmem:[#allocation2 + $0x4] sm:$0xf]
    %v261 = vld [vmem:[#allocation6] sm:$0xf]
    %v262 = vld [vmem:[#allocation6 + $0x4] sm:$0xf]
    %v263 = vld [vmem:[#allocation6 + $0x8] sm:$0xf]
    %v264 = vld [vmem:[#allocation6 + $0xc] sm:$0xf]
    %v265 = vld [vmem:[#allocation6 + $0x10] sm:$0xf]
    %v266 = vld [vmem:[#allocation6 + $0x14] sm:$0xf]
    %v267 = vld [vmem:[#allocation6 + $0x18] sm:$0xf]
    %v268 = vld [vmem:[#allocation6 + $0x1c] sm:$0xf]
    %v269 = vld [vmem:[#allocation6 + $0x20] sm:$0xf]
    %v270 = vld [vmem:[#allocation6 + $0x24] sm:$0xf]
    %v271 = vld [vmem:[#allocation6 + $0x28] sm:$0xf]
    %v272 = vld [vmem:[#allocation6 + $0x2c] sm:$0xf]
    %v273 = vld [vmem:[#allocation6 + $0x30] sm:$0xf]
    %v274 = vld [vmem:[#allocation6 + $0x34] sm:$0xf]
    %v275 = vld [vmem:[#allocation6 + $0x38] sm:$0xf]
    %v276 = vld [vmem:[#allocation6 + $0x3c] sm:$0xf]
    %v279 = vunpack.c.l.b16 %v259
    %v280 = vunpack.c.l.b16 %v260
    %v281 = vpack.c.b16 %v280, %v279
    %v299 = vunpack.c.l.b16 %v261
    %v300 = vunpack.c.l.b16 %v262
    %v301 = vunpack.c.l.b16 %v263
    %v302 = vunpack.c.l.b16 %v264
    %v303 = vunpack.c.l.b16 %v265
    %v304 = vunpack.c.l.b16 %v266
    %v305 = vunpack.c.l.b16 %v267
    %v306 = vunpack.c.l.b16 %v268
    %v307 = vunpack.c.l.b16 %v269
    %v308 = vunpack.c.l.b16 %v270
    %v309 = vunpack.c.l.b16 %v271
    %v310 = vunpack.c.l.b16 %v272
    %v311 = vunpack.c.l.b16 %v273
    %v312 = vunpack.c.l.b16 %v274
    %v313 = vunpack.c.l.b16 %v275
    %v314 = vunpack.c.l.b16 %v276
    %v315 = vpack.c.b16 %v300, %v299
    %v316 = vpack.c.b16 %v302, %v301
    %v317 = vpack.c.b16 %v304, %v303
    %v318 = vpack.c.b16 %v306, %v305
    %v319 = vpack.c.b16 %v308, %v307
    %v320 = vpack.c.b16 %v310, %v309
    %v321 = vpack.c.b16 %v312, %v311
    %v322 = vpack.c.b16 %v314, %v313
    %331 = vmatprep.subr.bf16.mxu0 0
    %332 = vmatpush1.bf16.msra.mxu0 %v322
    %333 = vmatprep.subr.bf16.mxu0 0
    %334 = vmatpush1.bf16.msra.mxu0 %v321
    %335 = vmatprep.subr.bf16.mxu0 0
    %336 = vmatpush1.bf16.msra.mxu0 %v320
    %337 = vmatprep.subr.bf16.mxu0 0
    %338 = vmatpush1.bf16.msra.mxu0 %v319
    %339 = vmatprep.subr.bf16.mxu0 0
    %340 = vmatpush1.bf16.msra.mxu0 %v318
    %341 = vmatprep.subr.bf16.mxu0 0
    %342 = vmatpush1.bf16.msra.mxu0 %v317
    %343 = vmatprep.subr.bf16.mxu0 0
    %344 = vmatpush1.bf16.msra.mxu0 %v316
    %345 = vmatprep.subr.bf16.mxu0 0
    %346 = vmatpush1.bf16.msra.mxu0 %v315
    %347 = vmatprep.subr.bf16.mxu0 0
    %348 = vmatpush2.bf16.msra.mxu0 0
    %349 = vmatprep.subr.bf16.mxu0 0
    %350 = vmatpush2.bf16.msra.mxu0 0
    %351 = vmatprep.subr.bf16.mxu0 0
    %352 = vmatpush2.bf16.msra.mxu0 0
    %353 = vmatprep.subr.bf16.mxu0 0
    %354 = vmatpush2.bf16.msra.mxu0 0
    %355 = vmatprep.subr.bf16.mxu0 0
    %356 = vmatpush2.bf16.msra.mxu0 0
    %357 = vmatprep.subr.bf16.mxu0 0
    %358 = vmatpush2.bf16.msra.mxu0 0
    %359 = vmatprep.subr.bf16.mxu0 0
    %360 = vmatpush2.bf16.msra.mxu0 0
    %361 = vmatprep.subr.bf16.mxu0 0
    %362 = vmatpush2.bf16.msra.mxu0 0
    %363 = vmatprep.mubr.bf16.mxu0 0
    %364 = vmatmul.mubr.bf16.gmra.mxu0 %v281
    %v365 = vpop.f32.mrf.mxu0
    %v366 = vadd.f32 0.0, %v365
    %v367 = vpop.f32.mrf.mxu0
    %v368 = vpop.f32.mrf.mxu0
    %v369 = vadd.f32 0.0, %v368
    %v370 = vpop.f32.mrf.mxu0
    %371 = vdwg.mxu0
    %v372 = vmul.f32 %v176, %v366
    %v373 = vmul.f32 %v181, %v369
    %v374 = vpack.c.bf16 %v373, %v372
    %375 = vmatprep.subr.bf16.mxu0 0
    %376 = vmatpush1.bf16.msra.mxu0 0
    %377 = vmatprep.subr.bf16.mxu0 0
    %378 = vmatpush1.bf16.msra.mxu0 0
    %379 = vmatprep.subr.bf16.mxu0 0
    %380 = vmatpush1.bf16.msra.mxu0 0
    %381 = vmatprep.subr.bf16.mxu0 0
    %382 = vmatpush1.bf16.msra.mxu0 0
    %383 = vmatprep.subr.bf16.mxu0 0
    %384 = vmatpush1.bf16.msra.mxu0 0
    %385 = vmatprep.subr.bf16.mxu0 0
    %386 = vmatpush1.bf16.msra.mxu0 0
    %387 = vmatprep.subr.bf16.mxu0 0
    %388 = vmatpush1.bf16.msra.mxu0 0
    %389 = vmatprep.subr.bf16.mxu0 0
    %390 = vmatpush1.bf16.msra.mxu0 %v374
    %391 = vmatprep.subr.bf16.mxu0 0
    %392 = vmatpush2.bf16.msra.mxu0 0
    %393 = vmatprep.subr.bf16.mxu0 0
    %394 = vmatpush2.bf16.msra.mxu0 0
    %395 = vmatprep.subr.bf16.mxu0 0
    %396 = vmatpush2.bf16.msra.mxu0 0
    %397 = vmatprep.subr.bf16.mxu0 0
    %398 = vmatpush2.bf16.msra.mxu0 0
    %399 = vmatprep.subr.bf16.mxu0 0
    %400 = vmatpush2.bf16.msra.mxu0 0
    %401 = vmatprep.subr.bf16.mxu0 0
    %402 = vmatpush2.bf16.msra.mxu0 0
    %403 = vmatprep.subr.bf16.mxu0 0
    %404 = vmatpush2.bf16.msra.mxu0 0
    %405 = vmatprep.subr.bf16.mxu0 0
    %406 = vmatpush2.bf16.msra.mxu0 0
    %407 = vmatprep.mubr.bf16.mxu0 0
    %408 = vmatmul.mubr.bf16.gmra.mxu0 %v193
    %v409 = vpop.f32.mrf.mxu0
    %v410 = vadd.f32 0.0, %v409
    %v411 = vpop.f32.mrf.mxu0
    %v412 = vpop.f32.mrf.mxu0
    %v413 = vadd.f32 0.0, %v412
    %v414 = vpop.f32.mrf.mxu0
    %415 = vdwg.mxu0
    %v416 = vmul.f32 %v176, %v410
    %v417 = vmul.f32 %v181, %v413
    %v418 = vld [vmem:[%s6] sm:$0x1]
    %v420 = vlaneseq
    %v421 = vshrl.u32 %v420, 7
    %v422 = vsub.s32 0, %v421
    %v423 = vrot.slane %v418, %v422
    %v425 = vadd.f32 %v416, %v423
    %v426 = vadd.f32 %v417, %v423
    %v427 = vmax.f32 %v425, 0.0
    %v428 = vmax.f32 %v426, 0.0
    %429 = vst [vmem:[#allocation8] sm:$0xff] %v427
    %430 = vst [vmem:[#allocation8 + $0x8] sm:$0xff] %v428
    // Predicated region
    $region38: #{tpu_custom_call.1} parent=1 // pred_check
      _
    $region39: #{tpu_custom_call.1} parent=1 // pred_check_branch
      %432 = sbr.rel (0) target = $region41
    $region40: #{tpu_custom_call.1} parent=1 // pred_region
      %s434 = ssub.s32 256, 256
      %435 = vsyncadd [#allocation5], %s434
      %s436 = sshll.u32 [#allocation8], 4
      %s437 = int_to_ptr.vmem [resolvable:$true] %s436
      %442 = dma.vmem_to_hbm [thread:$0]  %s437, 256, %s7, [#allocation5], 128, 128, 8
    $region41: #{tpu_custom_call.1} parent=1 // pred_fallthru
      _
    // Predicated region
    $region42: #{tpu_custom_call.1} parent=1 // pred_check
      _
    $region43: #{tpu_custom_call.1} parent=1 // pred_check_branch
      %444 = sbr.rel (0) target = $region45
    $region44: #{tpu_custom_call.1} parent=1 // pred_region
      %445 = dma.done [#allocation5], 256
    $region45: #{tpu_custom_call.1} parent=1 // pred_fallthru
      _
    %446 = vsyncpa [#allocation4], 1
    %447 = vsyncpa [#allocation7], 1
    %448 = vsyncpa [#allocation5], 1

</llo_original>
